<compile_context>
chip_gen: v6e
topology: v6e:2x2x1
jax: 0.10.0
libtpu: 0.0.40
codegen_flags: <defaults>
</compile_context>

<pallas_src>
import functools

import jax
import jax.numpy as jnp
import numpy as np
from jax import lax
from jax.experimental import pallas as pl
from jax.experimental.pallas import tpu as pltpu


def _cdiv(a: int, b: int) -> int:
    return (a + b - 1) // b


def _vmem_capacity_bytes() -> int:
    """Physical VMEM per core; conservative (v7x, 64 MiB) fallback."""
    try:
        return int(pltpu.get_tpu_info().vmem_capacity_bytes)
    except Exception:
        return 64 * 1024 * 1024


def _choose_sizes(n_rows: int, vocab: int, itemsize: int):
    """Pick (row_tile, vocab_chunk, vmem_limit_bytes) with honest accounting:
    double-buffered logits chunk + ~2 full-chunk int32 argmax temporaries
    + lane-padded labels double-buffer + 4 lane-padded per-row scratch cols."""
    vocab_chunk = vocab if vocab <= 2048 else 1024

    vmem_cap = _vmem_capacity_bytes()
    vmem_limit = min((vmem_cap * 3) // 4, 100 * 1024 * 1024)
    usable = (vmem_limit * 4) // 5            # slack for compiler scratch

    per_row = (2 * vocab_chunk * itemsize     # double-buffered logits chunk
               + 8 * vocab_chunk              # int32 argmax temporaries
               + 2 * 128 * 4                  # labels double-buffer (lane pad)
               + 4 * 128 * 4)                 # per-row scratch columns
    rows = usable // per_row
    rows = max(32, min(rows, 8192))
    rows = (rows // 32) * 32
    # Never let the row block exceed the array; keep an ordinary ragged tail.
    if n_rows >= 8:
        rows = min(rows, n_rows if n_rows % 8 == 0 else (n_rows // 8) * 8)
    else:
        rows = n_rows                         # tiny input: full-dim block
    return rows, vocab_chunk, int(vmem_limit)


def _accuracy_kernel(logits_ref, labels_ref, correct_ref, valid_ref,
                     run_max, run_arg, corr_col, valid_col, *,
                     ignore_index: int, vocab: int, n_rows: int,
                     row_tile: int, vocab_chunk: int, tiles_per_split: int,
                     mask_cols: bool):
    c = pl.program_id(0)                 # megacore split (parallel)
    t = pl.program_id(1)                 # row tiles within the split
    v = pl.program_id(2)                 # vocab chunks (innermost reduction)
    n_t = pl.num_programs(1)
    n_v = pl.num_programs(2)

    @pl.when(jnp.logical_and(t == 0, v == 0))
    def _init_counts():
        corr_col[...] = jnp.zeros_like(corr_col)
        valid_col[...] = jnp.zeros_like(valid_col)

    @pl.when(v == 0)
    def _init_running():
        run_max[...] = jnp.full_like(run_max, -jnp.inf)
        run_arg[...] = jnp.full_like(run_arg, vocab)   # sentinel (never a label)

    x = logits_ref[...]                                   # (row_tile, C) native
    col0 = v * vocab_chunk
    local_col = lax.broadcasted_iota(jnp.int32, x.shape, 1)
    if mask_cols:
        # Only the last (ragged) vocab chunk has columns >= vocab; mask them.
        neg = jnp.asarray(jnp.finfo(x.dtype).min, dtype=x.dtype)
        x = jnp.where(local_col < (vocab - col0), x, neg)

    # Chunk-local argmax with first-occurrence tie-breaking (matches torch).
    # Native-dtype compares are order-preserving, so equivalent to .float().
    chunk_max = jnp.max(x, axis=-1, keepdims=True)                    # (TN, 1)
    cand = jnp.where(x == chunk_max, local_col, jnp.int32(vocab_chunk))
    chunk_arg = jnp.min(cand, axis=-1, keepdims=True) + col0          # (TN, 1)

    # Running (max, argmax): strictly-greater update keeps the earliest index.
    cm = chunk_max.astype(jnp.float32)
    better = cm > run_max[...]
    run_arg[...] = jnp.where(better, chunk_arg, run_arg[...])
    run_max[...] = jnp.maximum(run_max[...], cm)

    @pl.when(v == n_v - 1)
    def _finish_row_tile():
        labels = labels_ref[...]                                      # (TN, 1)
        row0 = (c * tiles_per_split + t) * row_tile
        row = row0 + lax.broadcasted_iota(jnp.int32, labels.shape, 0)
        valid = jnp.logical_and(labels != jnp.int32(ignore_index),
                                row < jnp.int32(n_rows))
        correct = jnp.logical_and(run_arg[...] == labels, valid)
        # Element-wise (VPU) accumulation; cross-sublane reduce is deferred.
        corr_col[...] += correct.astype(jnp.int32)
        valid_col[...] += valid.astype(jnp.int32)

    @pl.when(jnp.logical_and(t == n_t - 1, v == n_v - 1))
    def _finalize():
        cs = jnp.sum(corr_col[...], keepdims=True).astype(jnp.float32)
        vs = jnp.sum(valid_col[...], keepdims=True).astype(jnp.float32)
        correct_ref[...] = jnp.broadcast_to(cs, correct_ref.shape)
        valid_ref[...] = jnp.broadcast_to(vs, valid_ref.shape)


def test_accuracy_pallas(logits, labels, ignore_index: int = -100, *,
                         row_tile=None, vocab_chunk=None):
    """Returns (correct_count, valid_count) as float32 scalars."""
    logits = jnp.asarray(logits)
    labels = jnp.asarray(labels)
    if not jnp.issubdtype(logits.dtype, jnp.floating):
        logits = logits.astype(jnp.float32)      # rare; matches .float()

    V = int(logits.shape[-1])
    N = int(np.prod(logits.shape[:-1])) if logits.ndim > 1 else 1

    logits2 = logits.reshape(N, V)               # native dtype, no cast/pad
    labels2 = labels.reshape(N, 1).astype(jnp.int32)

    itemsize = int(jnp.dtype(logits2.dtype).itemsize)
    auto_rows, auto_chunk, vmem_limit = _choose_sizes(N, V, itemsize)
    row_tile = auto_rows if row_tile is None else int(row_tile)
    vocab_chunk = auto_chunk if vocab_chunk is None else int(vocab_chunk)

    n_tiles = _cdiv(N, row_tile)
    n_vchunks = _cdiv(V, vocab_chunk)
    mask_cols = (V % vocab_chunk) != 0
    # Megacore split only when it divides evenly: no clamped/wasted DMAs.
    n_splits = 2 if (n_tiles >= 2 and n_tiles % 2 == 0) else 1
    tiles_per_split = n_tiles // n_splits

    kernel = functools.partial(
        _accuracy_kernel, ignore_index=int(ignore_index), vocab=V, n_rows=N,
        row_tile=row_tile, vocab_chunk=vocab_chunk,
        tiles_per_split=tiles_per_split, mask_cols=mask_cols)

    def logits_map(ci, ti, vi):
        return (ci * tiles_per_split + ti, vi)

    def labels_map(ci, ti, vi):
        return (ci * tiles_per_split + ti, 0)    # constant along vi: no re-DMA

    def out_map(ci, ti, vi):
        return (ci, 0)

    try:
        cost = pl.CostEstimate(
            flops=2 * N * V, transcendentals=0,
            bytes_accessed=N * V * itemsize + N * 4 + n_splits * 2 * 8 * 128 * 4)
    except Exception:
        cost = None

    correct_o, valid_o = pl.pallas_call(
        kernel,
        out_shape=(jax.ShapeDtypeStruct((n_splits * 8, 128), jnp.float32),
                   jax.ShapeDtypeStruct((n_splits * 8, 128), jnp.float32)),
        grid_spec=pltpu.PrefetchScalarGridSpec(
            num_scalar_prefetch=0,
            grid=(n_splits, tiles_per_split, n_vchunks),
            in_specs=[
                pl.BlockSpec((row_tile, vocab_chunk), logits_map),
                pl.BlockSpec((row_tile, 1), labels_map),
            ],
            out_specs=(
                pl.BlockSpec((8, 128), out_map),
                pl.BlockSpec((8, 128), out_map),
            ),
            scratch_shapes=[
                pltpu.VMEM((row_tile, 1), jnp.float32),   # running row max
                pltpu.VMEM((row_tile, 1), jnp.int32),     # running row argmax
                pltpu.VMEM((row_tile, 1), jnp.int32),     # correct counts
                pltpu.VMEM((row_tile, 1), jnp.int32),     # valid counts
            ]),
        compiler_params=pltpu.CompilerParams(
            dimension_semantics=("parallel", "arbitrary", "arbitrary"),
            vmem_limit_bytes=int(vmem_limit)),
        cost_estimate=cost,
    )(logits2, labels2)

    # Each split broadcast its exact int count (as f32) over an (8,128) tile;
    # pick one element per split and sum the partials.
    correct = jnp.sum(correct_o[::8, 0])
    valid = jnp.sum(valid_o[::8, 0])
    return correct, valid


class TestAccuracy:
    """Pallas counterpart of the PyTorch TestAccuracy module (no parameters)."""

    def __init__(self, ignore_index: int = -100):
        self.ignore_index = ignore_index

    def __call__(self, inputs, target):
        return test_accuracy_pallas(inputs, target, self.ignore_index)


def _reference(logits, labels, ignore_index=-100):
    valid = labels != ignore_index
    pred = jnp.argmax(logits.astype(jnp.float32), axis=-1)
    return (jnp.sum((pred == labels) & valid).astype(jnp.float32),
            jnp.sum(valid).astype(jnp.float32))


if __name__ == "__main__":
    key = jax.random.PRNGKey(0)
    k_logits, k_labels, k_mask, k2, k3 = jax.random.split(key, 5)

    # --- primary demo: batch=2, seq=8, vocab=32 -----------------------------
    B, S, V = 2, 8, 32
    logits = jax.random.normal(k_logits, (B, S, V), dtype=jnp.float32)
    labels = jax.random.randint(k_labels, (B, S), 0, V, dtype=jnp.int32)
    drop = jax.random.bernoulli(k_mask, 0.25, (B, S))
    labels = jnp.where(drop, jnp.int32(-100), labels)

    module = TestAccuracy(ignore_index=-100)
    correct, valid = module(logits, labels)
    jax.block_until_ready((correct, valid))

    ref_c, ref_v = _reference(logits, labels)
    assert float(correct) == float(ref_c), (float(correct), float(ref_c))
    assert float(valid) == float(ref_v), (float(valid), float(ref_v))

    # --- exercise the vocab-chunked argmax path (V > 2048, ragged chunk) ----
    ka, kb, kc = jax.random.split(k2, 3)
    lg2 = jax.random.normal(ka, (2, 16, 3000), dtype=jnp.float32)
    lb2 = jax.random.randint(kb, (2, 16), 0, 3000, dtype=jnp.int32)
    lb2 = jnp.where(jax.random.bernoulli(kc, 0.2, (2, 16)), jnp.int32(-100), lb2)
    c2, v2 = test_accuracy_pallas(lg2, lb2)
    r2c, r2v = _reference(lg2, lb2)
    assert float(c2) == float(r2c) and float(v2) == float(r2v)

    # --- exercise multi row-tile accumulation, megacore split, ragged rows --
    kd, ke, kf = jax.random.split(k3, 3)
    lg3 = jax.random.normal(kd, (25, 10, 400), dtype=jnp.float32)   # N=250
    lb3 = jax.random.randint(ke, (25, 10), 0, 400, dtype=jnp.int32)
    lb3 = jnp.where(jax.random.bernoulli(kf, 0.3, (25, 10)), jnp.int32(-100), lb3)
    c3, v3 = test_accuracy_pallas(lg3, lb3, row_tile=64, vocab_chunk=128)
    r3c, r3v = _reference(lg3, lb3)
    assert float(c3) == float(r3c) and float(v3) == float(r3v)

    print("KERNEL_OK")
</pallas_src>

<mosaic_0001>
module attributes {stable_mosaic.version = 11 : i64} {
  func.func @_accuracy_kernel(%arg0: i32, %arg1: i32, %arg2: i32, %arg3: memref<16x32xf32, #tpu.memory_space<vmem>>, %arg4: memref<16x1xi32, #tpu.memory_space<vmem>>, %arg5: memref<8x128xf32, #tpu.memory_space<vmem>>, %arg6: memref<8x128xf32, #tpu.memory_space<vmem>>, %arg7: memref<16x1xf32, #tpu.memory_space<vmem>>, %arg8: memref<16x1xi32, #tpu.memory_space<vmem>>, %arg9: memref<16x1xi32, #tpu.memory_space<vmem>>, %arg10: memref<16x1xi32, #tpu.memory_space<vmem>>) attributes {dimension_semantics = [#tpu.dimension_semantics<parallel>, #tpu.dimension_semantics<arbitrary>, #tpu.dimension_semantics<arbitrary>], iteration_bounds = array<i64: 1, 1, 1>, scalar_prefetch = 0 : i64, scratch_operands = 4 : i64, tpu.core_type = #tpu.core_type<tc>, window_params = [{transform_indices = @transform_0, window_bounds = array<i64: 16, 32>}, {transform_indices = @transform_1, window_bounds = array<i64: 16, 1>}, {transform_indices = @transform_2, window_bounds = array<i64: 8, 128>}, {transform_indices = @transform_3, window_bounds = array<i64: 8, 128>}]} {
    %c0_i32 = arith.constant 0 : i32
    %0 = arith.cmpi eq, %arg1, %c0_i32 : i32
    %c0_i32_0 = arith.constant 0 : i32
    %1 = arith.cmpi eq, %arg2, %c0_i32_0 : i32
    %2 = arith.andi %0, %1 : i1
    %3 = arith.extui %2 : i1 to i32
    %c0_i32_1 = arith.constant 0 : i32
    %4 = arith.cmpi ne, %3, %c0_i32_1 : i32
    scf.if %4 {
      %c0_i32_22 = arith.constant 0 : i32
      %37 = vector.broadcast %c0_i32_22 : i32 to vector<16x1xi32>
      %c0_23 = arith.constant 0 : index
      %c0_24 = arith.constant 0 : index
      %38 = vector.load %arg9[%c0_23, %c0_24] : memref<16x1xi32, #tpu.memory_space<vmem>>, vector<16x1xi32>
      tpu.vector_store %arg9[%c0_23, %c0_24], %37 {strides = array<i32>} : memref<16x1xi32, #tpu.memory_space<vmem>>, vector<16x1xi32>,
      %c0_i32_25 = arith.constant 0 : i32
      %39 = vector.broadcast %c0_i32_25 : i32 to vector<16x1xi32>
      %c0_26 = arith.constant 0 : index
      %c0_27 = arith.constant 0 : index
      %40 = vector.load %arg10[%c0_26, %c0_27] : memref<16x1xi32, #tpu.memory_space<vmem>>, vector<16x1xi32>
      tpu.vector_store %arg10[%c0_26, %c0_27], %39 {strides = array<i32>} : memref<16x1xi32, #tpu.memory_space<vmem>>, vector<16x1xi32>,
    } else {
    }
    %c0_i32_2 = arith.constant 0 : i32
    %5 = arith.cmpi eq, %arg2, %c0_i32_2 : i32
    %6 = arith.extui %5 : i1 to i32
    %c0_i32_3 = arith.constant 0 : i32
    %7 = arith.cmpi ne, %6, %c0_i32_3 : i32
    scf.if %7 {
      %cst_22 = arith.constant 0xFF800000 : f32
      %37 = vector.broadcast %cst_22 : f32 to vector<16x1xf32>
      %c0_23 = arith.constant 0 : index
      %c0_24 = arith.constant 0 : index
      %38 = vector.load %arg7[%c0_23, %c0_24] : memref<16x1xf32, #tpu.memory_space<vmem>>, vector<16x1xf32>
      tpu.vector_store %arg7[%c0_23, %c0_24], %37 {strides = array<i32>} : memref<16x1xf32, #tpu.memory_space<vmem>>, vector<16x1xf32>,
      %c32_i32_25 = arith.constant 32 : i32
      %39 = vector.broadcast %c32_i32_25 : i32 to vector<16x1xi32>
      %c0_26 = arith.constant 0 : index
      %c0_27 = arith.constant 0 : index
      %40 = vector.load %arg8[%c0_26, %c0_27] : memref<16x1xi32, #tpu.memory_space<vmem>>, vector<16x1xi32>
      tpu.vector_store %arg8[%c0_26, %c0_27], %39 {strides = array<i32>} : memref<16x1xi32, #tpu.memory_space<vmem>>, vector<16x1xi32>,
    } else {
    }
    %c0 = arith.constant 0 : index
    %c0_4 = arith.constant 0 : index
    %8 = vector.load %arg3[%c0, %c0_4] : memref<16x32xf32, #tpu.memory_space<vmem>>, vector<16x32xf32>
    %c32_i32 = arith.constant 32 : i32
    %9 = arith.muli %arg2, %c32_i32 : i32
    %10 = tpu.iota {dimensions = array<i32: 1>} : vector<16x32xi32>
    %cst = arith.constant dense<0xFF800000> : vector<16xf32>
    %11 = vector.multi_reduction <maximumf>, %8, %cst [1] : vector<16x32xf32> to vector<16xf32>
    %12 = vector.shape_cast %11 : vector<16xf32> to vector<16x1xf32>
    %13 = vector.broadcast %12 : vector<16x1xf32> to vector<16x32xf32>
    %14 = arith.cmpf oeq, %8, %13 : vector<16x32xf32>
    %c32_i32_5 = arith.constant 32 : i32
    %15 = vector.broadcast %c32_i32_5 : i32 to vector<16x32xi32>
    %16 = arith.select %14, %10, %15 : vector<16x32xi1>, vector<16x32xi32>
    %cst_6 = arith.constant dense<2147483647> : vector<16xi32>
    %17 = vector.multi_reduction <minsi>, %16, %cst_6 [1] : vector<16x32xi32> to vector<16xi32>
    %18 = vector.shape_cast %17 : vector<16xi32> to vector<16x1xi32>
    %19 = vector.broadcast %9 : i32 to vector<16x1xi32>
    %20 = arith.addi %18, %19 : vector<16x1xi32>
    %c0_7 = arith.constant 0 : index
    %c0_8 = arith.constant 0 : index
    %21 = vector.load %arg7[%c0_7, %c0_8] : memref<16x1xf32, #tpu.memory_space<vmem>>, vector<16x1xf32>
    %22 = arith.cmpf ogt, %12, %21 : vector<16x1xf32>
    %c0_9 = arith.constant 0 : index
    %c0_10 = arith.constant 0 : index
    %23 = vector.load %arg8[%c0_9, %c0_10] : memref<16x1xi32, #tpu.memory_space<vmem>>, vector<16x1xi32>
    %24 = arith.select %22, %20, %23 : vector<16x1xi1>, vector<16x1xi32>
    %c0_11 = arith.constant 0 : index
    %c0_12 = arith.constant 0 : index
    %25 = vector.load %arg8[%c0_11, %c0_12] : memref<16x1xi32, #tpu.memory_space<vmem>>, vector<16x1xi32>
    tpu.vector_store %arg8[%c0_11, %c0_12], %24 {strides = array<i32>} : memref<16x1xi32, #tpu.memory_space<vmem>>, vector<16x1xi32>,
    %c0_13 = arith.constant 0 : index
    %c0_14 = arith.constant 0 : index
    %26 = vector.load %arg7[%c0_13, %c0_14] : memref<16x1xf32, #tpu.memory_space<vmem>>, vector<16x1xf32>
    %27 = arith.maximumf %26, %12 : vector<16x1xf32>
    %c0_15 = arith.constant 0 : index
    %c0_16 = arith.constant 0 : index
    %28 = vector.load %arg7[%c0_15, %c0_16] : memref<16x1xf32, #tpu.memory_space<vmem>>, vector<16x1xf32>
    tpu.vector_store %arg7[%c0_15, %c0_16], %27 {strides = array<i32>} : memref<16x1xf32, #tpu.memory_space<vmem>>, vector<16x1xf32>,
    %c0_i32_17 = arith.constant 0 : i32
    %29 = arith.cmpi eq, %arg2, %c0_i32_17 : i32
    %30 = arith.extui %29 : i1 to i32
    %c0_i32_18 = arith.constant 0 : i32
    %31 = arith.cmpi ne, %30, %c0_i32_18 : i32
    scf.if %31 {
      %c0_22 = arith.constant 0 : index
      %c0_23 = arith.constant 0 : index
      %37 = vector.load %arg4[%c0_22, %c0_23] : memref<16x1xi32, #tpu.memory_space<vmem>>, vector<16x1xi32>
      %c1_i32 = arith.constant 1 : i32
      %38 = arith.muli %arg0, %c1_i32 : i32
      %39 = arith.addi %38, %arg1 : i32
      %c16_i32 = arith.constant 16 : i32
      %40 = arith.muli %39, %c16_i32 : i32
      %41 = tpu.iota {dimensions = array<i32: 0>} : vector<16x1xi32>
      %42 = vector.broadcast %40 : i32 to vector<16x1xi32>
      %43 = arith.addi %42, %41 : vector<16x1xi32>
      %c-100_i32 = arith.constant -100 : i32
      %44 = vector.broadcast %c-100_i32 : i32 to vector<16x1xi32>
      %45 = arith.cmpi ne, %37, %44 : vector<16x1xi32>
      %c16_i32_24 = arith.constant 16 : i32
      %46 = vector.broadcast %c16_i32_24 : i32 to vector<16x1xi32>
      %47 = arith.cmpi slt, %43, %46 : vector<16x1xi32>
      %48 = arith.andi %45, %47 : vector<16x1xi1>
      %c0_25 = arith.constant 0 : index
      %c0_26 = arith.constant 0 : index
      %49 = vector.load %arg8[%c0_25, %c0_26] : memref<16x1xi32, #tpu.memory_space<vmem>>, vector<16x1xi32>
      %50 = arith.cmpi eq, %49, %37 : vector<16x1xi32>
      %51 = arith.andi %50, %48 : vector<16x1xi1>
      %c0_27 = arith.constant 0 : index
      %c0_28 = arith.constant 0 : index
      %52 = vector.load %arg9[%c0_27, %c0_28] : memref<16x1xi32, #tpu.memory_space<vmem>>, vector<16x1xi32>
      %53 = arith.extui %51 : vector<16x1xi1> to vector<16x1xi32>
      %54 = arith.addi %52, %53 : vector<16x1xi32>
      %c0_29 = arith.constant 0 : index
      %c0_30 = arith.constant 0 : index
      %55 = vector.load %arg9[%c0_29, %c0_30] : memref<16x1xi32, #tpu.memory_space<vmem>>, vector<16x1xi32>
      tpu.vector_store %arg9[%c0_29, %c0_30], %54 {strides = array<i32>} : memref<16x1xi32, #tpu.memory_space<vmem>>, vector<16x1xi32>,
      %c0_31 = arith.constant 0 : index
      %c0_32 = arith.constant 0 : index
      %56 = vector.load %arg10[%c0_31, %c0_32] : memref<16x1xi32, #tpu.memory_space<vmem>>, vector<16x1xi32>
      %57 = arith.extui %48 : vector<16x1xi1> to vector<16x1xi32>
      %58 = arith.addi %56, %57 : vector<16x1xi32>
      %c0_33 = arith.constant 0 : index
      %c0_34 = arith.constant 0 : index
      %59 = vector.load %arg10[%c0_33, %c0_34] : memref<16x1xi32, #tpu.memory_space<vmem>>, vector<16x1xi32>
      tpu.vector_store %arg10[%c0_33, %c0_34], %58 {strides = array<i32>} : memref<16x1xi32, #tpu.memory_space<vmem>>, vector<16x1xi32>,
    } else {
    }
    %c0_i32_19 = arith.constant 0 : i32
    %32 = arith.cmpi eq, %arg1, %c0_i32_19 : i32
    %c0_i32_20 = arith.constant 0 : i32
    %33 = arith.cmpi eq, %arg2, %c0_i32_20 : i32
    %34 = arith.andi %32, %33 : i1
    %35 = arith.extui %34 : i1 to i32
    %c0_i32_21 = arith.constant 0 : i32
    %36 = arith.cmpi ne, %35, %c0_i32_21 : i32
    scf.if %36 {
      %c0_22 = arith.constant 0 : index
      %c0_23 = arith.constant 0 : index
      %37 = vector.load %arg9[%c0_22, %c0_23] : memref<16x1xi32, #tpu.memory_space<vmem>>, vector<16x1xi32>
      %38 = vector.shape_cast %37 : vector<16x1xi32> to vector<1x16x1xi32>
      %cst_24 = arith.constant dense<0> : vector<1xi32>
      %39 = vector.multi_reduction <add>, %38, %cst_24 [1, 2] : vector<1x16x1xi32> to vector<1xi32>
      %40 = vector.shape_cast %39 : vector<1xi32> to vector<1x1x1xi32>
      %41 = vector.extract %40[0, 0, 0] : i32 from vector<1x1x1xi32>
      %42 = vector.broadcast %41 : i32 to vector<1x1xi32>
      %43 = arith.sitofp %42 : vector<1x1xi32> to vector<1x1xf32>
      %c0_25 = arith.constant 0 : index
      %c0_26 = arith.constant 0 : index
      %44 = vector.load %arg10[%c0_25, %c0_26] : memref<16x1xi32, #tpu.memory_space<vmem>>, vector<16x1xi32>
      %45 = vector.shape_cast %44 : vector<16x1xi32> to vector<1x16x1xi32>
      %cst_27 = arith.constant dense<0> : vector<1xi32>
      %46 = vector.multi_reduction <add>, %45, %cst_27 [1, 2] : vector<1x16x1xi32> to vector<1xi32>
      %47 = vector.shape_cast %46 : vector<1xi32> to vector<1x1x1xi32>
      %48 = vector.extract %47[0, 0, 0] : i32 from vector<1x1x1xi32>
      %49 = vector.broadcast %48 : i32 to vector<1x1xi32>
      %50 = arith.sitofp %49 : vector<1x1xi32> to vector<1x1xf32>
      %51 = vector.shape_cast %43 : vector<1x1xf32> to vector<1x1xf32>
      %52 = vector.broadcast %51 : vector<1x1xf32> to vector<8x128xf32>
      %c0_28 = arith.constant 0 : index
      %c0_29 = arith.constant 0 : index
      %53 = vector.load %arg5[%c0_28, %c0_29] : memref<8x128xf32, #tpu.memory_space<vmem>>, vector<8x128xf32>
      tpu.vector_store %arg5[%c0_28, %c0_29], %52 {strides = array<i32>} : memref<8x128xf32, #tpu.memory_space<vmem>>, vector<8x128xf32>,
      %54 = vector.shape_cast %50 : vector<1x1xf32> to vector<1x1xf32>
      %55 = vector.broadcast %54 : vector<1x1xf32> to vector<8x128xf32>
      %c0_30 = arith.constant 0 : index
      %c0_31 = arith.constant 0 : index
      %56 = vector.load %arg6[%c0_30, %c0_31] : memref<8x128xf32, #tpu.memory_space<vmem>>, vector<8x128xf32>
      tpu.vector_store %arg6[%c0_30, %c0_31], %55 {strides = array<i32>} : memref<8x128xf32, #tpu.memory_space<vmem>>, vector<8x128xf32>,
    } else {
    }
    return
  }
  func.func @transform_0(%arg0: i32, %arg1: i32, %arg2: i32) -> (i32, i32) {
    %c1_i32 = arith.constant 1 : i32
    %0 = arith.muli %arg0, %c1_i32 : i32
    %1 = arith.addi %0, %arg1 : i32
    %c0_i32 = arith.constant 0 : i32
    return %1, %arg2 : i32, i32
  }
  func.func @transform_1(%arg0: i32, %arg1: i32, %arg2: i32) -> (i32, i32) {
    %c1_i32 = arith.constant 1 : i32
    %0 = arith.muli %arg0, %c1_i32 : i32
    %1 = arith.addi %0, %arg1 : i32
    %c0_i32 = arith.constant 0 : i32
    %c0_i32_0 = arith.constant 0 : i32
    return %1, %c0_i32 : i32, i32
  }
  func.func @transform_2(%arg0: i32, %arg1: i32, %arg2: i32) -> (i32, i32) {
    %c0_i32 = arith.constant 0 : i32
    %c0_i32_0 = arith.constant 0 : i32
    return %arg0, %c0_i32 : i32, i32
  }
  func.func @transform_3(%arg0: i32, %arg1: i32, %arg2: i32) -> (i32, i32) {
    %c0_i32 = arith.constant 0 : i32
    %c0_i32_0 = arith.constant 0 : i32
    return %arg0, %c0_i32 : i32, i32
  }
}

</mosaic_0001>

<llo_original>
// kernel: tpu_custom_call.1
$region0: #{tpu_custom_call.1}
  #allocation0 [shape = 'u32[]', space=smem, size = 0x4, offset = 0x4, fixed_abs, tag = 'smem constant byte address 0x4 - core index']
  #allocation1 [shape = 'u32[144,128]{1,0:T(1,128)}', space=vmem, size = 0x12000, scoped, tag = 'internal scratch']
  #allocation2 [shape = 'f32[16,1]{1,0:T(8,128)}', space=vmem, size = 0x2000, scoped, tag = 'scratch operand']
  #allocation3 [shape = 's32[16,1]{1,0:T(8,128)}', space=vmem, size = 0x2000, scoped, tag = 'scratch operand']
  #allocation4 [shape = 's32[16,1]{1,0:T(8,128)}', space=vmem, size = 0x2000, scoped, tag = 'scratch operand']
  #allocation5 [shape = 's32[16,1]{1,0:T(8,128)}', space=vmem, size = 0x2000, scoped, tag = 'scratch operand']
  %s0 = inlined_call_operand.vmem [shape: f32[16,32], index: 0, kind: input, shape index: {}]
  %s1 = inlined_call_operand.vmem [shape: s32[16,1], index: 1, kind: input, shape index: {}]
  %s2 = inlined_call_operand.hbm [shape: f32[8,128], index: 2, kind: output, shape index: {0}]
  %s3 = inlined_call_operand.hbm [shape: f32[8,128], index: 3, kind: output, shape index: {1}]
  %4 = xla_tuple %s2, %s3
  %s5 = sld [smem:[#allocation0]]
  $region42: #{tpu_custom_call.1} parent=0
    _
  %s7 = ssub.s32 1, %s5
  %s8 = scalar_select 0, %s7, %s5
  $region1: #{tpu_custom_call.1} parent=0
    #allocation6 [shape = 'u8[4096]{0}', space=vmem, size = 0x1000, scoped, tag = 'output window, operand 0, single buffered']
    #allocation7 [shape = 's32[1]{0}', space=sflag, size = 0x4, scoped, tag = 'scoped memory for tpu_custom_call.1']
    #allocation8 [shape = 'u8[4096]{0}', space=vmem, size = 0x1000, scoped, tag = 'output window, operand 1, single buffered']
    #allocation9 [shape = 's32[1]{0}', space=sflag, size = 0x4, scoped, tag = 'scoped memory for tpu_custom_call.1']
    %9 = vsyncpa [#allocation7], 0
    %10 = vsyncpa [#allocation9], 0
    // Predicated region
    $region2: #{tpu_custom_call.1} parent=1 // pred_check
      _
    $region3: #{tpu_custom_call.1} parent=1 // pred_check_branch
      %12 = sbr.rel (0) target = $region5
    $region4: #{tpu_custom_call.1} parent=1 // pred_region
      %s13 = sadd.s32 0, 0
      %s14 = smul.u32 2, %s13
      %p15 = scmp.lt.s32.totalorder %s14, 1
      %s16 = scalar_select %p15, %s14, 1
      %s17 = smul.addr %s16, 8
      %s18 = scalar_lea.vmem %s0, %s17
      %s19 = sadd.s32 0, 0
      %s20 = smul.u32 2, %s19
    $region5: #{tpu_custom_call.1} parent=1 // pred_fallthru
      _
    // Predicated region
    $region6: #{tpu_custom_call.1} parent=1 // pred_check
      _
    $region7: #{tpu_custom_call.1} parent=1 // pred_check_branch
      %22 = sbr.rel (0) target = $region9
    $region8: #{tpu_custom_call.1} parent=1 // pred_region
      %s23 = sadd.s32 0, 0
      %s24 = smul.u32 2, %s23
      %p25 = scmp.lt.s32.totalorder %s24, 1
      %s26 = scalar_select %p25, %s24, 1
      %s27 = smul.addr %s26, 8
      %s28 = scalar_lea.vmem %s1, %s27
      %s29 = sadd.s32 0, 0
      %s30 = smul.u32 2, %s29
    $region9: #{tpu_custom_call.1} parent=1 // pred_fallthru
      _
    %s31 = sadd.s32 0, 0
    %s32 = smul.u32 2, %s31
    %p33 = scmp.lt.s32.totalorder %s32, 1
    %s34 = scalar_select %p33, %s32, 1
    %s35 = smul.addr %s34, 8
    %s36 = scalar_lea.vmem %s0, %s35
    %s37 = sadd.s32 0, 0
    %s38 = smul.u32 2, %s37
    %p39 = scmp.lt.s32.totalorder %s38, 1
    %s40 = scalar_select %p39, %s38, 1
    %s41 = smul.addr %s40, 8
    %s42 = scalar_lea.vmem %s1, %s41
    %s43 = sadd.s32 0, 0
    %s44 = smul.u32 2, %s43
    %p45 = scmp.lt.s32.totalorder %s44, 1
    %s46 = scalar_select %p45, %s44, 1
    %s47 = smul.addr %s46, 8
    %s48 = scalar_lea.vmem %s0, %s47
    %s49 = sadd.s32 0, 0
    %s50 = smul.u32 2, %s49
    %s51 = sadd.s32 0, 0
    %s52 = smul.u32 2, %s51
    %p53 = scmp.lt.s32.totalorder %s52, 1
    %s54 = scalar_select %p53, %s52, 1
    %s55 = smul.addr %s54, 8
    %s56 = scalar_lea.vmem %s1, %s55
    %s57 = sadd.s32 0, 0
    %s58 = smul.u32 2, %s57
    %p59 = scmp.eq.s32.totalorder 0, 0
    %p60 = scmp.eq.s32.totalorder 0, 0
    %p61 = pnand %p59, %p60
    %p62 = pneg %p61
    // Predicated region
    $region10: #{tpu_custom_call.1} parent=1 // pred_check
      _
    $region11: #{tpu_custom_call.1} parent=1 // pred_check_branch
      %64 = sbr.rel (%p61) target = $region13
    $region12: #{tpu_custom_call.1} parent=1 // pred_region
      %vm65 = vcmask 7168
      %66 = vst.msk [vmem:[#allocation4] sm:$0xff] %vm65, 0
      %67 = vst.msk [vmem:[#allocation4 + $0x8] sm:$0xff] %vm65, 0
      %68 = vst.msk [vmem:[#allocation5] sm:$0xff] %vm65, 0
      %69 = vst.msk [vmem:[#allocation5 + $0x8] sm:$0xff] %vm65, 0
    $region13: #{tpu_custom_call.1} parent=1 // pred_fallthru
      _
    // Predicated region
    $region14: #{tpu_custom_call.1} parent=1 // pred_check
      %p70 = pneg %p60
    $region15: #{tpu_custom_call.1} parent=1 // pred_check_branch
      %72 = sbr.rel (%p70) target = $region17
    $region16: #{tpu_custom_call.1} parent=1 // pred_region
      %vm73 = vcmask 7168
      %74 = vst.msk [vmem:[#allocation2] sm:$0xff] %vm73, -inf
      %75 = vst.msk [vmem:[#allocation2 + $0x8] sm:$0xff] %vm73, -inf
      %76 = vst.msk [vmem:[#allocation3] sm:$0xff] %vm73, 32
      %77 = vst.msk [vmem:[#allocation3 + $0x8] sm:$0xff] %vm73, 32
    $region17: #{tpu_custom_call.1} parent=1 // pred_fallthru
      _
    %v78 = vld [vmem:[%s48] sm:$0xff]
    %v79 = vld [vmem:[%s48 + $0x8] sm:$0xff]
    %s80 = smul.u32 0, 32
    %v81 = vlaneseq
    %v82 = vand.u32 %v81, 127
    %vm83 = vcmask 261120
    %v84 = vsel %vm83, %v78, -inf
    %85 = vmax.xlane.f32.xlu0 %v84
    %v86 = vpop.xlane.xlu0 %85
    %v87 = vsel %vm83, %v79, -inf
    %88 = vmax.xlane.f32.xlu0 %v87
    %v89 = vpop.xlane.xlu0 %88
    %vm90 = vcmp.eq.f32.partialorder %v78, %v86
    %vm91 = vcmp.eq.f32.partialorder %v79, %v89
    %v92 = vsel %vm90, %v82, 32
    %v93 = vsel %vm91, %v82, 32
    %v94 = vsel %vm83, %v92, 2147483647
    %v95 = vand.u32 %v94, 65535
    %v96 = vshra.s32 %v94, 16
    %v97 = vcvt.s32.f32 %v95
    %v98 = vcvt.s32.f32 %v96
    %99 = vmin.xlane.f32.xlu0 %v98
    %v100 = vpop.xlane.xlu0 %99
    %vm101 = vcmp.eq.f32.partialorder %v98, %v100
    %v102 = vsel %vm101, %v97, inf
    %103 = vmin.xlane.f32.xlu0 %v102
    %v104 = vpop.xlane.xlu0 %103
    %v105 = vcvt.f32.s32 %v104
    %v106 = vcvt.f32.s32 %v100
    %v107 = vshll.u32 %v106, 16
    %v108 = vadd.s32 %v107, %v105
    %v109 = vsel %vm83, %v93, 2147483647
    %v110 = vand.u32 %v109, 65535
    %v111 = vshra.s32 %v109, 16
    %v112 = vcvt.s32.f32 %v110
    %v113 = vcvt.s32.f32 %v111
    %114 = vmin.xlane.f32.xlu0 %v113
    %v115 = vpop.xlane.xlu0 %114
    %vm116 = vcmp.eq.f32.partialorder %v113, %v115
    %v117 = vsel %vm116, %v112, inf
    %118 = vmin.xlane.f32.xlu0 %v117
    %v119 = vpop.xlane.xlu0 %118
    %v120 = vcvt.f32.s32 %v119
    %v121 = vcvt.f32.s32 %v115
    %v122 = vshll.u32 %v121, 16
    %v123 = vadd.s32 %v122, %v120
    %v124 = vstv %s80
    %v125 = vadd.s32 %v108, %v124
    %v126 = vadd.s32 %v123, %v124
    %v127 = vld [vmem:[#allocation2] sm:$0xff]
    %v128 = vld [vmem:[#allocation2 + $0x8] sm:$0xff]
    %vm129 = vcmp.gt.f32.partialorder %v86, %v127
    %vm130 = vcmp.gt.f32.partialorder %v89, %v128
    %v131 = vld [vmem:[#allocation3] sm:$0xff]
    %v132 = vld [vmem:[#allocation3 + $0x8] sm:$0xff]
    %v133 = vsel %vm129, %v125, %v131
    %v134 = vsel %vm130, %v126, %v132
    %vm135 = vcmask 7168
    %136 = vst.msk [vmem:[#allocation3] sm:$0xff] %vm135, %v133
    %137 = vst.msk [vmem:[#allocation3 + $0x8] sm:$0xff] %vm135, %v134
    %v138 = vld [vmem:[#allocation2] sm:$0xff]
    %v139 = vld [vmem:[#allocation2 + $0x8] sm:$0xff]
    %v140 = vmax.f32 %v138, %v86
    %v141 = vmax.f32 %v139, %v89
    %142 = vst.msk [vmem:[#allocation2] sm:$0xff] %vm135, %v140
    %143 = vst.msk [vmem:[#allocation2 + $0x8] sm:$0xff] %vm135, %v141
    // Predicated region
    $region18: #{tpu_custom_call.1} parent=1 // pred_check
      %p144 = pneg %p60
    $region19: #{tpu_custom_call.1} parent=1 // pred_check_branch
      %146 = sbr.rel (%p144) target = $region21
    $region20: #{tpu_custom_call.1} parent=1 // pred_region
      %v147 = vld [vmem:[%s56] sm:$0xff]
      %v148 = vld [vmem:[%s56 + $0x8] sm:$0xff]
      %s149 = sadd.s32 0, 0
      %s150 = smul.u32 %s149, 16
      %v151 = vlaneseq
      %v152 = vshrl.u32 %v151, 7
      %v153 = vadd.s32 %v152, 8
      %v154 = vstv %s150
      %v155 = vadd.s32 %v154, %v152
      %v156 = vadd.s32 %v154, %v153
      %vm157 = vcmp.ne.s32.totalorder %v147, 4294967196
      %vm158 = vcmp.ne.s32.totalorder %v148, 4294967196
      %vm159 = vcmp.lt.s32.totalorder %v155, 16
      %vm160 = vcmp.lt.s32.totalorder %v156, 16
      %vm161 = vmand %vm157, %vm159
      %vm162 = vmand %vm158, %vm160
      %v163 = vld [vmem:[#allocation3] sm:$0xff]
      %v164 = vld [vmem:[#allocation3 + $0x8] sm:$0xff]
      %vm165 = vcmp.eq.s32.totalorder %v163, %v147
      %vm166 = vcmp.eq.s32.totalorder %v164, %v148
      %vm167 = vmand %vm165, %vm161
      %vm168 = vmand %vm166, %vm162
      %v169 = vld [vmem:[#allocation4] sm:$0xff]
      %v170 = vld [vmem:[#allocation4 + $0x8] sm:$0xff]
      %v171 = vsel %vm167, 1, 0
      %v172 = vsel %vm168, 1, 0
      %v173 = vadd.s32 %v169, %v171
      %v174 = vadd.s32 %v170, %v172
      %175 = vst.msk [vmem:[#allocation4] sm:$0xff] %vm135, %v173
      %176 = vst.msk [vmem:[#allocation4 + $0x8] sm:$0xff] %vm135, %v174
      %v177 = vld [vmem:[#allocation5] sm:$0xff]
      %v178 = vld [vmem:[#allocation5 + $0x8] sm:$0xff]
      %v179 = vsel %vm161, 1, 0
      %v180 = vsel %vm162, 1, 0
      %v181 = vadd.s32 %v177, %v179
      %v182 = vadd.s32 %v178, %v180
      %183 = vst.msk [vmem:[#allocation5] sm:$0xff] %vm135, %v181
      %184 = vst.msk [vmem:[#allocation5 + $0x8] sm:$0xff] %vm135, %v182
    $region21: #{tpu_custom_call.1} parent=1 // pred_fallthru
      _
    // Predicated region
    $region22: #{tpu_custom_call.1} parent=1 // pred_check
      _
    $region23: #{tpu_custom_call.1} parent=1 // pred_check_branch
      %186 = sbr.rel (%p61) target = $region25
    $region24: #{tpu_custom_call.1} parent=1 // pred_region
      %v187 = vld [vmem:[#allocation4] sm:$0xff]
      %v188 = vld [vmem:[#allocation4 + $0x8] sm:$0xff]
      %v189 = vsel %vm135, %v187, 0
      %v190 = vsel %vm135, %v188, 0
      %v191 = vadd.s32 %v189, %v190
      %v192 = vand.u32 %v191, 65535
      %v193 = vshrl.u32 %v191, 16
      %v194 = vcvt.s32.f32 %v192
      %v195 = vcvt.s32.f32 %v193
      %196 = vadd.xlane.f32.xlu0 %v194
      %v197 = vpop.xlane.xlu0 %196
      %198 = vadd.xlane.f32.xlu0 %v195
      %v199 = vpop.xlane.xlu0 %198
      %v200 = vcvt.f32.s32 %v197
      %v201 = vcvt.f32.s32 %v199
      %v202 = vshll.u32 %v201, 16
      %v203 = vadd.s32 %v202, %v200
      %v204 = vrot.slane %v203, 4
      %v205 = vadd.s32 %v203, %v204
      %v206 = vrot.slane %v205, 2
      %v207 = vadd.s32 %v205, %v206
      %v208 = vrot.slane %v207, 1
      %v209 = vadd.s32 %v207, %v208
      %s210 = vtos %v209
      %v211 = vstv %s210
      %v212 = vcvt.s32.f32 %v211
      %v213 = vld [vmem:[#allocation5] sm:$0xff]
      %v214 = vld [vmem:[#allocation5 + $0x8] sm:$0xff]
      %v215 = vsel %vm135, %v213, 0
      %v216 = vsel %vm135, %v214, 0
      %v217 = vadd.s32 %v215, %v216
      %v218 = vand.u32 %v217, 65535
      %v219 = vshrl.u32 %v217, 16
      %v220 = vcvt.s32.f32 %v218
      %v221 = vcvt.s32.f32 %v219
      %222 = vadd.xlane.f32.xlu0 %v220
      %v223 = vpop.xlane.xlu0 %222
      %224 = vadd.xlane.f32.xlu0 %v221
      %v225 = vpop.xlane.xlu0 %224
      %v226 = vcvt.f32.s32 %v223
      %v227 = vcvt.f32.s32 %v225
      %v228 = vshll.u32 %v227, 16
      %v229 = vadd.s32 %v228, %v226
      %v230 = vrot.slane %v229, 4
      %v231 = vadd.s32 %v229, %v230
      %v232 = vrot.slane %v231, 2
      %v233 = vadd.s32 %v231, %v232
      %v234 = vrot.slane %v233, 1
      %v235 = vadd.s32 %v233, %v234
      %s236 = vtos %v235
      %v237 = vstv %s236
      %v238 = vcvt.s32.f32 %v237
      %239 = vst [vmem:[#allocation6] sm:$0xff] %v212
      %240 = vst [vmem:[#allocation8] sm:$0xff] %v238
    $region25: #{tpu_custom_call.1} parent=1 // pred_fallthru
      _
    // Predicated region
    $region26: #{tpu_custom_call.1} parent=1 // pred_check
      _
    $region27: #{tpu_custom_call.1} parent=1 // pred_check_branch
      %242 = sbr.rel (0) target = $region29
    $region28: #{tpu_custom_call.1} parent=1 // pred_region
      %s244 = ssub.s32 128, 128
      %245 = vsyncadd [#allocation7], %s244
      %s247 = sshll.u32 [#allocation6], 4
      %s248 = int_to_ptr.vmem [resolvable:$true] %s247
      %250 = dma.vmem_to_hbm [thread:$0]  %s248, 128, %s2, [#allocation7]
    $region29: #{tpu_custom_call.1} parent=1 // pred_fallthru
      _
    // Predicated region
    $region30: #{tpu_custom_call.1} parent=1 // pred_check
      _
    $region31: #{tpu_custom_call.1} parent=1 // pred_check_branch
      %252 = sbr.rel (0) target = $region33
    $region32: #{tpu_custom_call.1} parent=1 // pred_region
      %s254 = ssub.s32 128, 128
      %255 = vsyncadd [#allocation9], %s254
      %s257 = sshll.u32 [#allocation8], 4
      %s258 = int_to_ptr.vmem [resolvable:$true] %s257
      %260 = dma.vmem_to_hbm [thread:$0]  %s258, 128, %s3, [#allocation9]
    $region33: #{tpu_custom_call.1} parent=1 // pred_fallthru
      _
    // Predicated region
    $region34: #{tpu_custom_call.1} parent=1 // pred_check
      _
    $region35: #{tpu_custom_call.1} parent=1 // pred_check_branch
      %262 = sbr.rel (0) target = $region37
    $region36: #{tpu_custom_call.1} parent=1 // pred_region
      %263 = dma.done [#allocation7], 128
    $region37: #{tpu_custom_call.1} parent=1 // pred_fallthru
      _
    // Predicated region
    $region38: #{tpu_custom_call.1} parent=1 // pred_check
      _
    $region39: #{tpu_custom_call.1} parent=1 // pred_check_branch
      %265 = sbr.rel (0) target = $region41
    $region40: #{tpu_custom_call.1} parent=1 // pred_region
      %266 = dma.done [#allocation9], 128
    $region41: #{tpu_custom_call.1} parent=1 // pred_fallthru
      _
    %267 = vsyncpa [#allocation7], 1
    %268 = vsyncpa [#allocation9], 1

</llo_original>
